<compile_context>
chip_gen: v6e
topology: v6e:2x2x1
jax: 0.10.0
libtpu: 0.0.40
codegen_flags: <defaults>
</compile_context>

<pallas_src>
import functools

import jax
import jax.numpy as jnp
from jax.experimental import pallas as pl
from jax.experimental.pallas import tpu as pltpu


def _round_up(x, m):
    return ((x + m - 1) // m) * m


def _sublane_tile(dtype):
    # 32-bit packs 8 rows / vreg, 16-bit packs 16, 8-bit packs 32.
    return {1: 32, 2: 16, 4: 8}.get(jnp.dtype(dtype).itemsize, 8)


def _vmem_policy():
    """Generation-aware (max_block_bytes, vmem_limit_bytes)."""
    try:
        cap = int(pltpu.get_tpu_info().vmem_capacity_bytes)
    except Exception:  # conservative default if the query is unavailable
        cap = 128 * 1024 * 1024
    if cap <= 64 * 1024 * 1024:          # v7x-class: 64 MiB per TensorCore
        max_block, limit = 2 * 1024 * 1024, 48 * 1024 * 1024
    else:                                 # v5e / v6e: 128 MiB
        max_block, limit = 4 * 1024 * 1024, 64 * 1024 * 1024
    limit = min(limit, int(cap * 3 // 4))  # always leave headroom
    return max_block, limit


def _layernorm2d_kernel(x_ref, w_ref, b_ref, o_ref, *, eps, upcast):
    """One block of shape (t_b, C, t_hw) or (t_b, C, t_sub, 128).

    The channel axis (axis 1) is always the full C, so the per-position
    reduction never crosses blocks.
    """
    x = x_ref[...]
    w = w_ref[...][None]          # (1, C, 1[, 1]) — matches x's rank
    b = b_ref[...][None]
    inv_c = 1.0 / x.shape[1]
    if upcast:
        # f32 everywhere (f32 inputs, or chips without bf16 VALU).
        xf = x.astype(jnp.float32)
        u = jnp.mean(xf, axis=1, keepdims=True)
        xc = xf - u
        s = jnp.mean(xc * xc, axis=1, keepdims=True)        # biased variance
        y = xc * jax.lax.rsqrt(s + eps)                      # rsqrt -> EUP slot
        o_ref[...] = (y * w + b).astype(o_ref.dtype)
    else:
        # bf16 elementwise chain; only the channel reductions accumulate in f32.
        # TODO(synk): v5e has no bf16 VALU — route bf16 inputs through the f32
        # path there once chip-version plumbing is available.
        u = jnp.sum(x, axis=1, keepdims=True, dtype=jnp.float32) * inv_c
        xc = x - u.astype(x.dtype)
        s = jnp.sum(xc * xc, axis=1, keepdims=True, dtype=jnp.float32) * inv_c
        inv = jax.lax.rsqrt(s + eps).astype(x.dtype)
        o_ref[...] = (xc * inv * w + b).astype(o_ref.dtype)


def layernorm2d(x, weight, bias, *, eps=1e-6):
    """x: (B, C, H, W); weight, bias: (C,).  Returns (B, C, H, W)."""
    B, C, H, W = x.shape
    HW = H * W
    itemsize = jnp.dtype(x.dtype).itemsize
    sub_t = _sublane_tile(x.dtype)
    max_block_bytes, vmem_limit = _vmem_policy()

    # bf16 inputs: keep elementwise math in bf16 (v6e/v7x); everything else f32.
    upcast = x.dtype != jnp.bfloat16

    # Small-C layout: pack spatial rows onto sublanes so tiny channel counts do
    # not waste half-empty sublane tiles.
    use_4d = (C < sub_t) and (HW % 128 == 0) and (HW >= 128)

    # ---- dtype/padding-aware VMEM accounting (bytes per spatial element) ----
    c_eff = C if use_4d else _round_up(C, sub_t)
    per_elem_buf = c_eff * itemsize                       # one in OR out block
    temp_bytes = 3 * c_eff * 4 if upcast else 2 * c_eff * itemsize
    per_elem_total = 4 * per_elem_buf + temp_bytes        # 2x in + 2x out + temps

    # ---- spatial tile (lanes): block cap, VMEM cap, pipeline cap ------------
    if HW <= 128:
        t_spatial = HW
    else:
        cap_block = max_block_bytes // per_elem_buf
        cap_vmem = (3 * vmem_limit // 4) // per_elem_total
        cap_pipe = max(_round_up(pl.cdiv(HW, 8), 128), 512)
        t_spatial = min(cap_block, cap_vmem, cap_pipe)
        t_spatial = max(128, (t_spatial // 128) * 128)
        t_spatial = min(t_spatial, _round_up(HW, 128))

    # ---- fold tiny images along the batch so each step moves real data ------
    t_b = 1
    if t_spatial >= HW:
        per_image = per_elem_buf * max(HW, 128)
        t_b = min(B, max(1, (1 << 20) // per_image))
        if B >= 2:                          # keep >= 2 grid steps (v7x: 2 TCs)
            t_b = min(t_b, (B + 1) // 2)
        while B % t_b != 0:                  # keep batch blocks full
            t_b -= 1

    # ---- build layout-specific blocks / grid --------------------------------
    if use_4d:
        n_rows = HW // 128
        if t_spatial >= HW:
            t_sub = n_rows
        elif n_rows >= 8:
            t_sub = max(8, (t_spatial // 128) // 8 * 8)
        else:
            t_sub = n_rows
        # Guarantee >= 2 grid steps for whole-image blocks at B == 1.
        if pl.cdiv(B, t_b) * pl.cdiv(n_rows, t_sub) < 2 and n_rows >= 16:
            t_sub = _round_up(pl.cdiv(n_rows, 2), 8)
        x_in = x.reshape(B, C, n_rows, 128)
        grid = (pl.cdiv(B, t_b), pl.cdiv(n_rows, t_sub))
        data_block = (t_b, C, t_sub, 128)
        data_map = lambda bi, si: (bi, 0, si, 0)
        param_shape = (C, 1, 1)
        param_map = lambda bi, si: (0, 0, 0)
        flat_shape = (B, C, n_rows, 128)
    else:
        t_hw = HW if t_spatial >= HW else t_spatial
        if pl.cdiv(B, t_b) * pl.cdiv(HW, t_hw) < 2 and HW >= 256:
            t_hw = _round_up(pl.cdiv(HW, 2), 128)
        x_in = x.reshape(B, C, HW)
        grid = (pl.cdiv(B, t_b), pl.cdiv(HW, t_hw))
        data_block = (t_b, C, t_hw)
        data_map = lambda bi, si: (bi, 0, si)
        param_shape = (C, 1)
        param_map = lambda bi, si: (0, 0)
        flat_shape = (B, C, HW)

    # Affine params pre-cast to the kernel's elementwise dtype (no in-kernel cast).
    param_dtype = jnp.float32 if upcast else x.dtype
    w_in = weight.astype(param_dtype).reshape(param_shape)
    b_in = bias.astype(param_dtype).reshape(param_shape)

    cost = pl.CostEstimate(
        flops=8 * B * C * HW,
        transcendentals=B * HW,
        bytes_accessed=2 * B * C * HW * itemsize,
    )

    out_flat = pl.pallas_call(
        functools.partial(_layernorm2d_kernel, eps=eps, upcast=upcast),
        out_shape=jax.ShapeDtypeStruct(flat_shape, x.dtype),
        grid_spec=pltpu.PrefetchScalarGridSpec(
            num_scalar_prefetch=0,
            grid=grid,
            in_specs=[
                pl.BlockSpec(data_block, data_map),
                pl.BlockSpec(param_shape, param_map),
                pl.BlockSpec(param_shape, param_map),
            ],
            out_specs=pl.BlockSpec(data_block, data_map),
        ),
        compiler_params=pltpu.CompilerParams(
            dimension_semantics=("parallel", "parallel"),
            vmem_limit_bytes=vmem_limit,
        ),
        cost_estimate=cost,
    )(x_in, w_in, b_in)

    return out_flat.reshape(B, C, H, W)


def _reference(x, weight, bias, eps=1e-6):
    u = jnp.mean(x, axis=1, keepdims=True)
    s = jnp.mean((x - u) ** 2, axis=1, keepdims=True)
    y = (x - u) / jnp.sqrt(s + eps)
    return weight[None, :, None, None] * y + bias[None, :, None, None]


if __name__ == "__main__":
    B, C, H, W = 2, 4, 16, 16
    key = jax.random.PRNGKey(0)
    x = jax.random.normal(key, (B, C, H, W), dtype=jnp.float32)

    # Deterministic parameter init matching nn.Parameter(torch.ones/zeros).
    weight = jnp.ones((C,), dtype=jnp.float32)
    bias = jnp.zeros((C,), dtype=jnp.float32)

    out = layernorm2d(x, weight, bias, eps=1e-6)
    out = jax.block_until_ready(out)

    ref = _reference(x, weight, bias, eps=1e-6)
    assert out.shape == (B, C, H, W)
    assert jnp.allclose(out, ref, atol=1e-5, rtol=1e-5)

    print("KERNEL_OK")
</pallas_src>

<mosaic_0001>
module attributes {stable_mosaic.version = 11 : i64} {
  func.func @_layernorm2d_kernel(%arg0: i32, %arg1: i32, %arg2: memref<1x4x2x128xf32, #tpu.memory_space<vmem>>, %arg3: memref<4x1x1xf32, #tpu.memory_space<vmem>>, %arg4: memref<4x1x1xf32, #tpu.memory_space<vmem>>, %arg5: memref<1x4x2x128xf32, #tpu.memory_space<vmem>>) attributes {dimension_semantics = [#tpu.dimension_semantics<parallel>, #tpu.dimension_semantics<parallel>], iteration_bounds = array<i64: 2, 1>, scalar_prefetch = 0 : i64, scratch_operands = 0 : i64, tpu.core_type = #tpu.core_type<tc>, window_params = [{transform_indices = @transform_0, window_bounds = array<i64: 1, 4, 2, 128>}, {pipeline_mode = #tpu.pipeline_mode<synchronous>, transform_indices = @transform_1, window_bounds = array<i64: 4, 1, 1>}, {pipeline_mode = #tpu.pipeline_mode<synchronous>, transform_indices = @transform_2, window_bounds = array<i64: 4, 1, 1>}, {transform_indices = @transform_3, window_bounds = array<i64: 1, 4, 2, 128>}]} {
    %c0 = arith.constant 0 : index
    %c0_0 = arith.constant 0 : index
    %c0_1 = arith.constant 0 : index
    %c0_2 = arith.constant 0 : index
    %0 = vector.load %arg2[%c0, %c0_0, %c0_1, %c0_2] : memref<1x4x2x128xf32, #tpu.memory_space<vmem>>, vector<1x4x2x128xf32>
    %c0_3 = arith.constant 0 : index
    %c0_4 = arith.constant 0 : index
    %c0_5 = arith.constant 0 : index
    %1 = vector.load %arg3[%c0_3, %c0_4, %c0_5] : memref<4x1x1xf32, #tpu.memory_space<vmem>>, vector<4x1x1xf32>
    %2 = vector.shape_cast %1 : vector<4x1x1xf32> to vector<1x4x1x1xf32>
    %c0_6 = arith.constant 0 : index
    %c0_7 = arith.constant 0 : index
    %c0_8 = arith.constant 0 : index
    %3 = vector.load %arg4[%c0_6, %c0_7, %c0_8] : memref<4x1x1xf32, #tpu.memory_space<vmem>>, vector<4x1x1xf32>
    %4 = vector.shape_cast %3 : vector<4x1x1xf32> to vector<1x4x1x1xf32>
    %cst = arith.constant dense<0.000000e+00> : vector<1x2x128xf32>
    %5 = vector.multi_reduction <add>, %0, %cst [1] : vector<1x4x2x128xf32> to vector<1x2x128xf32>
    %6 = vector.shape_cast %5 : vector<1x2x128xf32> to vector<1x1x2x128xf32>
    %cst_9 = arith.constant 4.000000e+00 : f32
    %7 = vector.broadcast %cst_9 : f32 to vector<1x1x2x128xf32>
    %8 = arith.divf %6, %7 : vector<1x1x2x128xf32>
    %9 = vector.broadcast %8 : vector<1x1x2x128xf32> to vector<1x4x2x128xf32>
    %10 = arith.subf %0, %9 : vector<1x4x2x128xf32>
    %11 = arith.mulf %10, %10 : vector<1x4x2x128xf32>
    %cst_10 = arith.constant dense<0.000000e+00> : vector<1x2x128xf32>
    %12 = vector.multi_reduction <add>, %11, %cst_10 [1] : vector<1x4x2x128xf32> to vector<1x2x128xf32>
    %13 = vector.shape_cast %12 : vector<1x2x128xf32> to vector<1x1x2x128xf32>
    %cst_11 = arith.constant 4.000000e+00 : f32
    %14 = vector.broadcast %cst_11 : f32 to vector<1x1x2x128xf32>
    %15 = arith.divf %13, %14 : vector<1x1x2x128xf32>
    %cst_12 = arith.constant 9.99999997E-7 : f32
    %16 = vector.broadcast %cst_12 : f32 to vector<1x1x2x128xf32>
    %17 = arith.addf %15, %16 : vector<1x1x2x128xf32>
    %18 = math.rsqrt %17 : vector<1x1x2x128xf32>
    %19 = vector.broadcast %18 : vector<1x1x2x128xf32> to vector<1x4x2x128xf32>
    %20 = arith.mulf %10, %19 : vector<1x4x2x128xf32>
    %21 = vector.broadcast %2 : vector<1x4x1x1xf32> to vector<1x4x2x128xf32>
    %22 = arith.mulf %20, %21 : vector<1x4x2x128xf32>
    %23 = vector.broadcast %4 : vector<1x4x1x1xf32> to vector<1x4x2x128xf32>
    %24 = arith.addf %22, %23 : vector<1x4x2x128xf32>
    %c0_13 = arith.constant 0 : index
    %c0_14 = arith.constant 0 : index
    %c0_15 = arith.constant 0 : index
    %c0_16 = arith.constant 0 : index
    %25 = vector.load %arg5[%c0_13, %c0_14, %c0_15, %c0_16] : memref<1x4x2x128xf32, #tpu.memory_space<vmem>>, vector<1x4x2x128xf32>
    tpu.vector_store %arg5[%c0_13, %c0_14, %c0_15, %c0_16], %24 {strides = array<i32>} : memref<1x4x2x128xf32, #tpu.memory_space<vmem>>, vector<1x4x2x128xf32>,
    return
  }
  func.func @transform_0(%arg0: i32, %arg1: i32) -> (i32, i32, i32, i32) {
    %c0_i32 = arith.constant 0 : i32
    %c0_i32_0 = arith.constant 0 : i32
    %c0_i32_1 = arith.constant 0 : i32
    return %arg0, %c0_i32, %arg1, %c0_i32_0 : i32, i32, i32, i32
  }
  func.func @transform_1(%arg0: i32, %arg1: i32) -> (i32, i32, i32) {
    %c0_i32 = arith.constant 0 : i32
    %c0_i32_0 = arith.constant 0 : i32
    %c0_i32_1 = arith.constant 0 : i32
    %c0_i32_2 = arith.constant 0 : i32
    return %c0_i32, %c0_i32_0, %c0_i32_1 : i32, i32, i32
  }
  func.func @transform_2(%arg0: i32, %arg1: i32) -> (i32, i32, i32) {
    %c0_i32 = arith.constant 0 : i32
    %c0_i32_0 = arith.constant 0 : i32
    %c0_i32_1 = arith.constant 0 : i32
    %c0_i32_2 = arith.constant 0 : i32
    return %c0_i32, %c0_i32_0, %c0_i32_1 : i32, i32, i32
  }
  func.func @transform_3(%arg0: i32, %arg1: i32) -> (i32, i32, i32, i32) {
    %c0_i32 = arith.constant 0 : i32
    %c0_i32_0 = arith.constant 0 : i32
    %c0_i32_1 = arith.constant 0 : i32
    return %arg0, %c0_i32, %arg1, %c0_i32_0 : i32, i32, i32, i32
  }
}

</mosaic_0001>

<llo_original>
// kernel: tpu_custom_call.1
$region0: #{tpu_custom_call.1}
  #allocation0 [shape = 'u32[]', space=smem, size = 0x4, offset = 0x4, fixed_abs, tag = 'smem constant byte address 0x4 - core index']
  #allocation1 [shape = 'u32[144,128]{1,0:T(1,128)}', space=vmem, size = 0x12000, scoped, tag = 'internal scratch']
  %s0 = inlined_call_operand.hbm [shape: f32[2,4,2,128], index: 0, kind: input, shape index: {}]
  %s1 = inlined_call_operand.vmem [shape: f32[4,1,1], index: 1, kind: input, shape index: {}]
  %s2 = inlined_call_operand.vmem [shape: f32[4,1,1], index: 2, kind: input, shape index: {}]
  %s3 = inlined_call_operand.hbm [shape: f32[2,4,2,128], index: 3, kind: output, shape index: {}]
  %s4 = sld [smem:[#allocation0]]
  $region49: #{tpu_custom_call.1} parent=0
    _
  %s6 = ssub.s32 1, %s4
  %s7 = scalar_select 0, %s6, %s4
  $region1: #{tpu_custom_call.1} parent=0
    #allocation2 [shape = 'u8[8192]{0}', space=vmem, size = 0x2000, scoped, tag = 'input window, operand 0']
    #allocation3 [shape = 's32[2]{0}', space=sflag, size = 0x8, scoped, tag = 'scoped memory for tpu_custom_call.1']
    #allocation4 [shape = 's32[2]{0}', space=sflag, size = 0x8, scoped, tag = 'scoped memory for tpu_custom_call.1']
    #allocation5 [shape = 'u8[8192]{0}', space=vmem, size = 0x2000, scoped, tag = 'output window, operand 0']
    %8 = vsyncpa [#allocation3], 0
    %s9 = scalar_lea.sflag [#allocation3], 1
    %10 = vsyncpa %s9, 0
    %11 = vsyncpa [#allocation4], 0
    %s12 = scalar_lea.sflag [#allocation4], 1
    %13 = vsyncpa %s12, 0
    loop: start=0, step=1, limit=4
    $region2: #{tpu_custom_call.1} parent=1 // loop_pre_header
      _
    $region3: #{tpu_custom_call.1} parent=1 // loop_header
      %s15 = sphi 0, %s19
      %p16 = scmp.ge.s32.totalorder %s15, 4
      %s22 = sphi 0, %s34
      %s23 = sphi 0, %s30
      %s24 = sphi 0, %s22
      %s25 = sphi 0, %s23
      %s26 = sphi 0, %s24
      %s27 = sphi 0, %s25
      %s39 = sphi 0, %s41
      %s42 = sphi 0, %s39
      %s43 = sphi 0, %s42
      %s59 = sphi 0, %s43
      %s63 = sphi 0, %s63
      %s65 = sphi 0, %s63
      %s66 = sphi 0, %s65
      %s80 = sphi 0, %s66
      %s84 = sphi 0, %s84
      %s86 = sphi 0, %s84
      %s87 = sphi 0, %s86
      %s101 = sphi 0, %s87
      %s109 = sphi 0, %s111
      %s112 = sphi 0, %s109
      %s113 = sphi 0, %s112
      %s129 = sphi 0, %s113
    $region4: #{tpu_custom_call.1} parent=1 // loop_header_branch
      %18 = sbr.rel (%p16) target = $region8
    $region5: #{tpu_custom_call.1} parent=1 // loop_body
      %s20 = ssub.s32 %s15, 1
      %s21 = ssub.s32 %s15, 2
      %s28 = sadd.s32 1, %s23
      %p29 = scmp.ge.s32.totalorder %s28, 1
      %s30 = scalar_select %p29, 0, %s28
      %s31 = sadd.s32 1, %s22
      %s32 = scalar_select %p29, %s31, %s22
      %p33 = scmp.ge.s32.totalorder %s32, 2
      %s34 = scalar_select %p33, 0, %s32
      %s35 = ssub.s32 %s22, %s34
      %s36 = ssub.s32 %s23, %s30
      %s37 = sor.u32 %s35, %s36
      %p38 = scmp.eq.s32.totalorder %s37, 0
      %s40 = sadd.s32 %s39, 1
      %s41 = scalar_select %p38, %s39, %s40
      %p44 = pneg %p38
      %p45 = scmp.eq.s32.totalorder %s15, 1
      %p46 = por %p44, %p45
      %p47 = scmp.ne.s32.totalorder %s39, %s42
      %p48 = scmp.eq.s32.totalorder %s15, 0
      %p49 = por %p47, %p48
      %p50 = scmp.ne.s32.totalorder %s39, %s42
      %p51 = scmp.eq.s32.totalorder %s20, 1
      %p52 = por %p50, %p51
      %p53 = scmp.ne.s32.totalorder %s42, %s43
      %p54 = scmp.eq.s32.totalorder %s20, 0
      %p55 = por %p53, %p54
      %p56 = scmp.ne.s32.totalorder %s42, %s43
      %p57 = scmp.eq.s32.totalorder %s21, 1
      %p58 = por %p56, %p57
      %p60 = scmp.ne.s32.totalorder %s43, %s59
      %p61 = scmp.eq.s32.totalorder %s21, 0
      %p62 = por %p60, %p61
      %s64 = sadd.s32 %s63, 1
      %p67 = scmp.eq.s32.totalorder %s15, 1
      %p68 = scmp.ne.s32.totalorder %s63, %s65
      %p69 = scmp.eq.s32.totalorder %s15, 0
      %p70 = por %p68, %p69
      %p71 = scmp.ne.s32.totalorder %s63, %s65
      %p72 = scmp.eq.s32.totalorder %s20, 1
      %p73 = por %p71, %p72
      %p74 = scmp.ne.s32.totalorder %s65, %s66
      %p75 = scmp.eq.s32.totalorder %s20, 0
      %p76 = por %p74, %p75
      %p77 = scmp.ne.s32.totalorder %s65, %s66
      %p78 = scmp.eq.s32.totalorder %s21, 1
      %p79 = por %p77, %p78
      %p81 = scmp.ne.s32.totalorder %s66, %s80
      %p82 = scmp.eq.s32.totalorder %s21, 0
      %p83 = por %p81, %p82
      %s85 = sadd.s32 %s84, 1
      %p88 = scmp.eq.s32.totalorder %s15, 1
      %p89 = scmp.ne.s32.totalorder %s84, %s86
      %p90 = scmp.eq.s32.totalorder %s15, 0
      %p91 = por %p89, %p90
      %p92 = scmp.ne.s32.totalorder %s84, %s86
      %p93 = scmp.eq.s32.totalorder %s20, 1
      %p94 = por %p92, %p93
      %p95 = scmp.ne.s32.totalorder %s86, %s87
      %p96 = scmp.eq.s32.totalorder %s20, 0
      %p97 = por %p95, %p96
      %p98 = scmp.ne.s32.totalorder %s86, %s87
      %p99 = scmp.eq.s32.totalorder %s21, 1
      %p100 = por %p98, %p99
      %p102 = scmp.ne.s32.totalorder %s87, %s101
      %p103 = scmp.eq.s32.totalorder %s21, 0
      %p104 = por %p102, %p103
      %s105 = ssub.s32 %s22, %s34
      %s106 = ssub.s32 %s23, %s30
      %s107 = sor.u32 %s105, %s106
      %p108 = scmp.eq.s32.totalorder %s107, 0
      %s110 = sadd.s32 %s109, 1
      %s111 = scalar_select %p108, %s109, %s110
      %p114 = pneg %p108
      %p115 = scmp.eq.s32.totalorder %s15, 1
      %p116 = por %p114, %p115
      %p117 = scmp.ne.s32.totalorder %s109, %s112
      %p118 = scmp.eq.s32.totalorder %s15, 0
      %p119 = por %p117, %p118
      %p120 = scmp.ne.s32.totalorder %s109, %s112
      %p121 = scmp.eq.s32.totalorder %s20, 1
      %p122 = por %p120, %p121
      %p123 = scmp.ne.s32.totalorder %s112, %s113
      %p124 = scmp.eq.s32.totalorder %s20, 0
      %p125 = por %p123, %p124
      %p126 = scmp.ne.s32.totalorder %s112, %s113
      %p127 = scmp.eq.s32.totalorder %s21, 1
      %p128 = por %p126, %p127
      %p130 = scmp.ne.s32.totalorder %s113, %s129
      %p131 = scmp.eq.s32.totalorder %s21, 0
      %p132 = por %p130, %p131
      %p133 = scmp.le.s32.totalorder 1, %s15
      %p134 = scmp.lt.s32.totalorder %s15, 3
      %p135 = pnand %p133, %p134
      %p136 = pneg %p135
      // Predicated region
      $region9: #{tpu_custom_call.1} parent=5 // pred_check
        _
      $region10: #{tpu_custom_call.1} parent=5 // pred_check_branch
        %138 = sbr.rel (%p135) target = $region12
      $region11: #{tpu_custom_call.1} parent=5 // pred_region
        %s139 = ssub.s32 %s15, 1
        // Predicated region
        $region13: #{tpu_custom_call.1} parent=11 // pred_check
          %p140 = pneg %p76
        $region14: #{tpu_custom_call.1} parent=11 // pred_check_branch
          %142 = sbr.rel (%p140) target = $region16
        $region15: #{tpu_custom_call.1} parent=11 // pred_region
          _
        $region16: #{tpu_custom_call.1} parent=11 // pred_fallthru
          _
        // Predicated region
        $region17: #{tpu_custom_call.1} parent=11 // pred_check
          %p143 = pneg %p97
        $region18: #{tpu_custom_call.1} parent=11 // pred_check_branch
          %145 = sbr.rel (%p143) target = $region20
        $region19: #{tpu_custom_call.1} parent=11 // pred_region
          _
        $region20: #{tpu_custom_call.1} parent=11 // pred_fallthru
          _
      $region12: #{tpu_custom_call.1} parent=5 // pred_fallthru
        _
      %p146 = scmp.lt.s32.totalorder %s15, 2
      // Predicated region
      $region21: #{tpu_custom_call.1} parent=5 // pred_check
        %p147 = pneg %p146
      $region22: #{tpu_custom_call.1} parent=5 // pred_check_branch
        %149 = sbr.rel (%p147) target = $region24
      $region23: #{tpu_custom_call.1} parent=5 // pred_region
        // Predicated region
        $region25: #{tpu_custom_call.1} parent=23 // pred_check
          %p150 = pneg %p49
        $region26: #{tpu_custom_call.1} parent=23 // pred_check_branch
          %152 = sbr.rel (%p150) target = $region28
        $region27: #{tpu_custom_call.1} parent=23 // pred_region
          %s153 = sand.u32 %s39, 1
          %s154 = scalar_lea.sflag [#allocation3], %s153
          %s155 = sand.u32 %s39, 1
          %s156 = smul.addr %s155, 8
          %s157 = scalar_lea.vmem [#allocation2], %s156
          %s159 = ssub.s32 128, 128
          %160 = vsyncadd %s154, %s159
          %s161 = smul.addr %s22, 4
          %s162 = sadd.s32 %s23, %s161
          %s163 = smul.addr %s162, 32
          %s164 = scalar_lea.hbm %s0, %s163
          %s165 = sshll.u32 %s157, 4
          %s166 = int_to_ptr.vmem [resolvable:$true] %s165
          %171 = dma.hbm_to_vmem [thread:$0]  %s164, 128, %s166, %s154, 32, 32, 2
        $region28: #{tpu_custom_call.1} parent=23 // pred_fallthru
          _
      $region24: #{tpu_custom_call.1} parent=5 // pred_fallthru
        _
      %p172 = scmp.le.s32.totalorder 1, %s15
      %p173 = scmp.lt.s32.totalorder %s15, 3
      %p174 = pnand %p172, %p173
      %p175 = pneg %p174
      // Predicated region
      $region29: #{tpu_custom_call.1} parent=5 // pred_check
        _
      $region30: #{tpu_custom_call.1} parent=5 // pred_check_branch
        %177 = sbr.rel (%p174) target = $region32
      $region31: #{tpu_custom_call.1} parent=5 // pred_region
        %s178 = ssub.s32 %s15, 1
        %s179 = sand.u32 %s42, 1
        %s180 = scalar_lea.sflag [#allocation3], %s179
        %s181 = sand.u32 %s42, 1
        %s182 = smul.addr %s181, 8
        %s183 = scalar_lea.vmem [#allocation2], %s182
        // Predicated region
        $region33: #{tpu_custom_call.1} parent=31 // pred_check
          %p184 = pneg %p55
        $region34: #{tpu_custom_call.1} parent=31 // pred_check_branch
          %186 = sbr.rel (%p184) target = $region36
        $region35: #{tpu_custom_call.1} parent=31 // pred_region
          %187 = dma.done %s180, 128
        $region36: #{tpu_custom_call.1} parent=31 // pred_fallthru
          _
        %s188 = sand.u32 %s42, 1
        %s189 = scalar_lea.sflag [#allocation3], %s188
        %s190 = sand.u32 %s42, 1
        %s191 = smul.addr %s190, 8
        %s192 = scalar_lea.vmem [#allocation2], %s191
        %p193 = pneg %p55
        %p194 = pneg %p52
        %p195 = pneg %p76
        %p196 = pneg %p73
        %p197 = pneg %p97
        %p198 = pneg %p94
        %p199 = pneg %p125
        %p200 = pneg %p122
        %s201 = sand.u32 %s112, 1
        %s202 = scalar_lea.sflag [#allocation4], %s201
        %s203 = sand.u32 %s112, 1
        %s204 = smul.addr %s203, 8
        %s205 = scalar_lea.vmem [#allocation5], %s204
        %v206 = vld [vmem:[%s183] sm:$0x3]
        %v207 = vld [vmem:[%s183 + $0x2] sm:$0x3]
        %v208 = vld [vmem:[%s183 + $0x4] sm:$0x3]
        %v209 = vld [vmem:[%s183 + $0x6] sm:$0x3]
        %v210 = vld [vmem:[%s1] sm:$0x1]
        %v211 = vld [vmem:[%s1 + $0x1] sm:$0x1]
        %v212 = vld [vmem:[%s1 + $0x2] sm:$0x1]
        %v213 = vld [vmem:[%s1 + $0x3] sm:$0x1]
        %v214 = vld [vmem:[%s2] sm:$0x1]
        %v215 = vld [vmem:[%s2 + $0x1] sm:$0x1]
        %v216 = vld [vmem:[%s2 + $0x2] sm:$0x1]
        %v217 = vld [vmem:[%s2 + $0x3] sm:$0x1]
        %vm218 = vcmask 1041408
        %v219 = vsel %vm218, %v206, 0.0
        %v220 = vsel %vm218, %v207, 0.0
        %v221 = vadd.f32 %v219, %v220
        %v222 = vsel %vm218, %v208, 0.0
        %v223 = vadd.f32 %v221, %v222
        %v224 = vsel %vm218, %v209, 0.0
        %v225 = vadd.f32 %v223, %v224
        %v226 = vrcp.pop 4.0
        %v227 = vmul.f32 %v225, %v226
        %v228 = vsub.f32 %v206, %v227
        %v229 = vsub.f32 %v207, %v227
        %v230 = vsub.f32 %v208, %v227
        %v231 = vsub.f32 %v209, %v227
        %v232 = vmul.f32 %v228, %v228
        %v233 = vmul.f32 %v229, %v229
        %v234 = vmul.f32 %v230, %v230
        %v235 = vmul.f32 %v231, %v231
        %v236 = vsel %vm218, %v232, 0.0
        %v237 = vsel %vm218, %v233, 0.0
        %v238 = vadd.f32 %v236, %v237
        %v239 = vsel %vm218, %v234, 0.0
        %v240 = vadd.f32 %v238, %v239
        %v241 = vsel %vm218, %v235, 0.0
        %v242 = vadd.f32 %v240, %v241
        %v243 = vmul.f32 %v242, %v226
        %v244 = vadd.f32 %v243, 1e-06
        %v245 = vrsqrt.pop %v244
        %v246 = vmul.f32 %v228, %v245
        %v247 = vmul.f32 %v229, %v245
        %v248 = vmul.f32 %v230, %v245
        %v249 = vmul.f32 %v231, %v245
        %v254 = vlaneseq
        %v255 = vshrl.u32 %v254, 7
        %v256 = vsub.s32 0, %v255
        %v257 = vrot.slane %v210, %v256
        %v258 = vlaneseq
        %v259 = vshrl.u32 %v258, 7
        %v260 = vsub.s32 0, %v259
        %v261 = vrot.slane %v211, %v260
        %v262 = vlaneseq
        %v263 = vshrl.u32 %v262, 7
        %v264 = vsub.s32 0, %v263
        %v265 = vrot.slane %v212, %v264
        %v266 = vlaneseq
        %v267 = vshrl.u32 %v266, 7
        %v268 = vsub.s32 0, %v267
        %v269 = vrot.slane %v213, %v268
        %270 = vset.pattern.permute.xlu0 0
        %271 = vperm.xlu0 %270, %v257
        %v272 = vpop.permute.xlu0 %271
        %274 = vset.pattern.permute.xlu0 0
        %275 = vperm.xlu0 %274, %v261
        %v276 = vpop.permute.xlu0 %275
        %278 = vset.pattern.permute.xlu0 0
        %279 = vperm.xlu0 %278, %v265
        %v280 = vpop.permute.xlu0 %279
        %282 = vset.pattern.permute.xlu0 0
        %283 = vperm.xlu0 %282, %v269
        %v284 = vpop.permute.xlu0 %283
        %v286 = vmul.f32 %v246, %v272
        %v287 = vmul.f32 %v247, %v276
        %v288 = vmul.f32 %v248, %v280
        %v289 = vmul.f32 %v249, %v284
        %v294 = vlaneseq
        %v295 = vshrl.u32 %v294, 7
        %v296 = vsub.s32 0, %v295
        %v297 = vrot.slane %v214, %v296
        %v298 = vlaneseq
        %v299 = vshrl.u32 %v298, 7
        %v300 = vsub.s32 0, %v299
        %v301 = vrot.slane %v215, %v300
        %v302 = vlaneseq
        %v303 = vshrl.u32 %v302, 7
        %v304 = vsub.s32 0, %v303
        %v305 = vrot.slane %v216, %v304
        %v306 = vlaneseq
        %v307 = vshrl.u32 %v306, 7
        %v308 = vsub.s32 0, %v307
        %v309 = vrot.slane %v217, %v308
        %310 = vset.pattern.permute.xlu0 0
        %311 = vperm.xlu0 %310, %v297
        %v312 = vpop.permute.xlu0 %311
        %314 = vset.pattern.permute.xlu0 0
        %315 = vperm.xlu0 %314, %v301
        %v316 = vpop.permute.xlu0 %315
        %318 = vset.pattern.permute.xlu0 0
        %319 = vperm.xlu0 %318, %v305
        %v320 = vpop.permute.xlu0 %319
        %322 = vset.pattern.permute.xlu0 0
        %323 = vperm.xlu0 %322, %v309
        %v324 = vpop.permute.xlu0 %323
        %v326 = vadd.f32 %v286, %v312
        %v327 = vadd.f32 %v287, %v316
        %v328 = vadd.f32 %v288, %v320
        %v329 = vadd.f32 %v289, %v324
        %330 = vst [vmem:[%s205] sm:$0x3] %v326
        %331 = vst [vmem:[%s205 + $0x2] sm:$0x3] %v327
        %332 = vst [vmem:[%s205 + $0x4] sm:$0x3] %v328
        %333 = vst [vmem:[%s205 + $0x6] sm:$0x3] %v329
        %s334 = sand.u32 %s112, 1
        %s335 = scalar_lea.sflag [#allocation4], %s334
        %s336 = sand.u32 %s112, 1
        %s337 = smul.addr %s336, 8
        %s338 = scalar_lea.vmem [#allocation5], %s337
        // Predicated region
        $region37: #{tpu_custom_call.1} parent=31 // pred_check
          %p339 = pneg %p122
        $region38: #{tpu_custom_call.1} parent=31 // pred_check_branch
          %341 = sbr.rel (%p339) target = $region40
        $region39: #{tpu_custom_call.1} parent=31 // pred_region
          %s343 = ssub.s32 128, 128
          %344 = vsyncadd %s335, %s343
          %s345 = smul.addr %s24, 4
          %s346 = sadd.s32 %s25, %s345
          %s347 = smul.addr %s346, 32
          %s348 = scalar_lea.hbm %s3, %s347
          %s349 = sshll.u32 %s338, 4
          %s350 = int_to_ptr.vmem [resolvable:$true] %s349
          %355 = dma.vmem_to_hbm [thread:$0]  %s350, 128, %s348, %s335, 32, 32, 2
        $region40: #{tpu_custom_call.1} parent=31 // pred_fallthru
          _
      $region32: #{tpu_custom_call.1} parent=5 // pred_fallthru
        _
      %p356 = scmp.le.s32.totalorder 2, %s15
      // Predicated region
      $region41: #{tpu_custom_call.1} parent=5 // pred_check
        %p357 = pneg %p356
      $region42: #{tpu_custom_call.1} parent=5 // pred_check_branch
        %359 = sbr.rel (%p357) target = $region44
      $region43: #{tpu_custom_call.1} parent=5 // pred_region
        %s360 = ssub.s32 %s15, 2
        // Predicated region
        $region45: #{tpu_custom_call.1} parent=43 // pred_check
          %p361 = pneg %p128
        $region46: #{tpu_custom_call.1} parent=43 // pred_check_branch
          %363 = sbr.rel (%p361) target = $region48
        $region47: #{tpu_custom_call.1} parent=43 // pred_region
          %s364 = sand.u32 %s113, 1
          %s365 = scalar_lea.sflag [#allocation4], %s364
          %s366 = sand.u32 %s113, 1
          %s367 = smul.addr %s366, 8
          %s368 = scalar_lea.vmem [#allocation5], %s367
          %369 = dma.done %s365, 128
        $region48: #{tpu_custom_call.1} parent=43 // pred_fallthru
          _
      $region44: #{tpu_custom_call.1} parent=5 // pred_fallthru
        _
    $region6: #{tpu_custom_call.1} parent=1 // loop_footer
      %s19 = sadd.s32 1, %s15
    $region7: #{tpu_custom_call.1} parent=1 // loop_footer_branch
      %14 = sbr.rel target = $region3
    $region8: #{tpu_custom_call.1} parent=1 // loop_exit
      _
    %370 = vsyncpa [#allocation3], 1
    %s371 = scalar_lea.sflag [#allocation3], 1
    %372 = vsyncpa %s371, 1
    %373 = vsyncpa [#allocation4], 1
    %s374 = scalar_lea.sflag [#allocation4], 1
    %375 = vsyncpa %s374, 1

</llo_original>
